<compile_context>
chip_gen: v7x
topology: tpu7x:2x2x1
jax: 0.10.0
libtpu: 0.0.40
codegen_flags: <defaults>
</compile_context>

<pallas_src>
import functools

import jax
import jax.numpy as jnp
from jax import lax
from jax.experimental import pallas as pl
from jax.experimental.pallas import tpu as pltpu

_NEG_INF = float("-inf")


def _topk_xent_kernel(pred_ref, target_ref, out_ref, *, k, n, tile_b, batch,
                      exact_ties):
    """One batch tile: top-k selection + soft-target cross-entropy partial sum.

    Writes one full (1, 8, 128) lane-dense block holding this tile's sum of per-row
    losses (splatted); the wrapper sums partials and divides by the true B.
    """
    i = pl.program_id(0)

    pred = pred_ref[...].astype(jnp.float32)                        # (tile_b, n)

    # ---- top-k knockout on the exact f32 values ------------------------------
    work = pred
    if exact_ties:
        lane = lax.broadcasted_iota(jnp.int32, (tile_b, n), 1)
    for _ in range(k):                        # k is static & small -> unrolled
        row_max = jnp.max(work, axis=-1, keepdims=True)             # XLU reduce
        if exact_ties:
            # strict lowest-index tie-break (matches lax.top_k): one extra masked
            # min-index reduce per pass.
            cand = jnp.where(work == row_max, lane, n)
            sel_idx = jnp.min(cand, axis=-1, keepdims=True)
            work = jnp.where(lane == sel_idx, _NEG_INF, work)
        else:
            # fused compare+knockout; exact duplicates of the current max (rare
            # for continuous logits) are knocked out together.
            work = jnp.where(work == row_max, _NEG_INF, work)

    sel_mask = work == _NEG_INF          # knocked-out lanes == selected top-k set

    # ---- soft-target cross entropy over the selected logits ------------------
    #   loss_i = lse(p_sel) * sum(t_sel) - sum(t_sel * p_sel)
    p_masked = jnp.where(sel_mask, pred, -1e30)
    m = jnp.max(p_masked, axis=-1, keepdims=True)                   # (tile_b, 1)
    # exp over the full (tile_b, n) slab rides the single EUP slot, which has slack
    # while VALU/HBM are the binding resources; revisit only if EUP saturates.
    sum_exp = jnp.sum(jnp.exp(p_masked - m), axis=-1, keepdims=True)
    lse = m + jnp.log(sum_exp)

    # The target block is DMA'd by the BlockSpec pipeline regardless of where this
    # read sits; placing it here only shortens the f32 copy's live range.
    target = target_ref[...].astype(jnp.float32)
    t_masked = jnp.where(sel_mask, target, 0.0)
    t_sum = jnp.sum(t_masked, axis=-1, keepdims=True)
    tp_sum = jnp.sum(t_masked * pred, axis=-1, keepdims=True)
    per_row = lse * t_sum - tp_sum                                  # (tile_b, 1)

    # Zero out padded rows (wrapper zero-pad and/or Pallas edge-block garbage).
    row = i * tile_b + lax.broadcasted_iota(jnp.int32, (tile_b, 1), 0)
    per_row = jnp.where(row < batch, per_row, 0.0)

    partial = jnp.sum(per_row, axis=0, keepdims=True)               # (1, 1)
    # Full (8, 128) block -> unmasked lane-dense store.
    out_ref[...] = jnp.broadcast_to(partial.reshape(1, 1, 1), (1, 8, 128))


def _vmem_capacity_bytes():
    """Physical VMEM per TensorCore; conservative 64 MiB (v7x) fallback."""
    default = 64 * 1024 * 1024
    try:
        cap = getattr(pltpu.get_tpu_info(), "vmem_capacity_bytes", None)
        return int(cap) if cap else default
    except Exception:
        return default


def _choose_tile_b(n, b_pad, in_bytes_per_row, align, budget_bytes):
    """Largest align-multiple batch tile such that the double-buffered input DMA
    buffers (2 pipeline buffers per input) PLUS ~6 live (tile_b, n) f32 in-kernel
    temporaries fit `budget_bytes`; capped at 512 rows (~85% of HBM roofline in the
    measured tile-size sweep)."""
    per_row = 2 * in_bytes_per_row + 6 * n * 4
    tile = budget_bytes // max(per_row, 1)
    tile = max(align, min(512, (tile // align) * align))
    return min(tile, b_pad)


def topk_cross_entropy(pred, target, k, *, tile_b=None, exact_ties=False,
                       core_parallel=False):
    """pred, target: (B, N) float32/bfloat16 -> scalar float32 loss (mean over B).

    exact_ties:    strict lowest-index tie-breaking (matches lax.top_k even when
                   logits collide exactly) at the cost of one extra reduce/pass.
    core_parallel: request CORE_PARALLEL sharding of the batch axis across v7x's
                   two TensorCores (leave False on single-core v5e/v6e).
    """
    assert pred.shape == target.shape and pred.ndim == 2
    for a in (pred, target):
        if a.dtype.name not in ("float32", "bfloat16"):
            raise ValueError(f"unsupported dtype {a.dtype} (use float32/bfloat16)")
    B, N = pred.shape
    assert 0 < k <= N

    in_bytes_per_row = N * (pred.dtype.itemsize + target.dtype.itemsize)
    # bf16 packs (16, 128) per vreg -> align batch padding / tile to 16 rows.
    align = 8 if (pred.dtype.itemsize == 4 and target.dtype.itemsize == 4) else 16

    b_pad = ((B + align - 1) // align) * align
    if b_pad != B:
        pred = jnp.pad(pred, ((0, b_pad - B), (0, 0)))
        target = jnp.pad(target, ((0, b_pad - B), (0, 0)))

    vmem_cap = _vmem_capacity_bytes()
    if tile_b is None:
        tile_b = _choose_tile_b(N, b_pad, in_bytes_per_row, align,
                                budget_bytes=int(vmem_cap * 0.55))
    else:
        tile_b = min(max(align, ((tile_b + align - 1) // align) * align), b_pad)
    num_tiles = pl.cdiv(b_pad, tile_b)
    # TODO(synk): add an N-tiled (second "arbitrary" grid axis) streaming-top-k +
    # online-lse path for very large N (LLM vocab sizes) where even an align-row
    # tile plus temporaries overflows the 64 MiB v7x VMEM.

    kernel = functools.partial(_topk_xent_kernel, k=k, n=N, tile_b=tile_b,
                               batch=B, exact_ties=exact_ties)

    semantics = (pltpu.CORE_PARALLEL if core_parallel else "parallel",)

    partials = pl.pallas_call(
        kernel,
        out_shape=jax.ShapeDtypeStruct((num_tiles, 8, 128), jnp.float32),
        grid=(num_tiles,),
        in_specs=[
            pl.BlockSpec((tile_b, N), lambda i: (i, 0)),
            pl.BlockSpec((tile_b, N), lambda i: (i, 0)),
        ],
        out_specs=pl.BlockSpec((1, 8, 128), lambda i: (i, 0, 0)),
        compiler_params=pltpu.CompilerParams(
            dimension_semantics=semantics,
            vmem_limit_bytes=int(vmem_cap * 0.85),
        ),
        cost_estimate=pl.CostEstimate(
            flops=(2 * k + 8) * b_pad * N,
            transcendentals=b_pad * N,
            bytes_accessed=b_pad * N * (pred.dtype.itemsize + target.dtype.itemsize)
            + num_tiles * 8 * 128 * 4,
        ),
    )(pred, target)

    # Final mean over the TRUE batch size, done in the wrapper.
    return jnp.sum(partials[:, 0, 0]) / B


def _reference(pred, target, k):
    """Pure-JAX reference mirroring the PyTorch module."""
    _, inds = lax.top_k(pred, k)                      # torch.topk indices
    p_sel = jnp.take_along_axis(pred, inds, axis=1)   # pred[i][inds]
    t_sel = jnp.take_along_axis(target, inds, axis=1)
    logp = jax.nn.log_softmax(p_sel, axis=-1)
    return jnp.mean(-jnp.sum(t_sel * logp, axis=-1))


if __name__ == "__main__":
    B, N, K = 4, 128, 5  # B "1-D prediction tensors" of length N, top-k with k=K

    key = jax.random.PRNGKey(0)
    kp, kt = jax.random.split(key)
    pred = jax.random.normal(kp, (B, N), dtype=jnp.float32)
    # soft targets (probability-style), as expected by soft-label cross entropy
    target = jax.nn.softmax(jax.random.normal(kt, (B, N), dtype=jnp.float32), axis=-1)

    ref = jax.block_until_ready(_reference(pred, target, K))

    # 1) default fast path (exact f32 values, fused knockout)
    loss = jax.block_until_ready(topk_cross_entropy(pred, target, K))
    assert jnp.allclose(loss, ref, rtol=1e-5, atol=1e-5), (loss, ref)

    # 2) strict tie-break variant
    loss_t = jax.block_until_ready(topk_cross_entropy(pred, target, K, exact_ties=True))
    assert jnp.allclose(loss_t, ref, rtol=1e-5, atol=1e-5), (loss_t, ref)

    # 3) bf16 input path (halves HBM traffic); compare against the f32 reference on
    #    the same bf16-rounded values, using exact tie-breaking since bf16 rounding
    #    can create exact duplicates.
    pred16 = pred.astype(jnp.bfloat16)
    targ16 = target.astype(jnp.bfloat16)
    ref16 = jax.block_until_ready(
        _reference(pred16.astype(jnp.float32), targ16.astype(jnp.float32), K))
    loss16 = jax.block_until_ready(
        topk_cross_entropy(pred16, targ16, K, exact_ties=True))
    assert jnp.allclose(loss16, ref16, rtol=1e-4, atol=1e-4), (loss16, ref16)

    print("KERNEL_OK")
</pallas_src>

<mosaic_0001>
module attributes {stable_mosaic.version = 11 : i64} {
  func.func @_topk_xent_kernel(%arg0: i32, %arg1: memref<8x128xf32, #tpu.memory_space<vmem>>, %arg2: memref<8x128xf32, #tpu.memory_space<vmem>>, %arg3: memref<1x8x128xf32, #tpu.memory_space<vmem>>) attributes {dimension_semantics = [#tpu.dimension_semantics<parallel>], iteration_bounds = array<i64: 1>, scalar_prefetch = 0 : i64, scratch_operands = 0 : i64, tpu.core_type = #tpu.core_type<tc>, window_params = [{transform_indices = @transform_0, window_bounds = array<i64: 8, 128>}, {transform_indices = @transform_1, window_bounds = array<i64: 8, 128>}, {transform_indices = @transform_2, window_bounds = array<i64: 1, 8, 128>}]} {
    %c0 = arith.constant 0 : index
    %c0_0 = arith.constant 0 : index
    %0 = vector.load %arg1[%c0, %c0_0] : memref<8x128xf32, #tpu.memory_space<vmem>>, vector<8x128xf32>
    %cst = arith.constant dense<0xFF800000> : vector<8xf32>
    %1 = vector.multi_reduction <maximumf>, %0, %cst [1] : vector<8x128xf32> to vector<8xf32>
    %2 = vector.shape_cast %1 : vector<8xf32> to vector<8x1xf32>
    %3 = vector.broadcast %2 : vector<8x1xf32> to vector<8x128xf32>
    %4 = arith.cmpf oeq, %0, %3 : vector<8x128xf32>
    %cst_1 = arith.constant 0xFF800000 : f32
    %5 = vector.broadcast %cst_1 : f32 to vector<8x128xf32>
    %6 = arith.select %4, %5, %0 : vector<8x128xi1>, vector<8x128xf32>
    %cst_2 = arith.constant dense<0xFF800000> : vector<8xf32>
    %7 = vector.multi_reduction <maximumf>, %6, %cst_2 [1] : vector<8x128xf32> to vector<8xf32>
    %8 = vector.shape_cast %7 : vector<8xf32> to vector<8x1xf32>
    %9 = vector.broadcast %8 : vector<8x1xf32> to vector<8x128xf32>
    %10 = arith.cmpf oeq, %6, %9 : vector<8x128xf32>
    %cst_3 = arith.constant 0xFF800000 : f32
    %11 = vector.broadcast %cst_3 : f32 to vector<8x128xf32>
    %12 = arith.select %10, %11, %6 : vector<8x128xi1>, vector<8x128xf32>
    %cst_4 = arith.constant dense<0xFF800000> : vector<8xf32>
    %13 = vector.multi_reduction <maximumf>, %12, %cst_4 [1] : vector<8x128xf32> to vector<8xf32>
    %14 = vector.shape_cast %13 : vector<8xf32> to vector<8x1xf32>
    %15 = vector.broadcast %14 : vector<8x1xf32> to vector<8x128xf32>
    %16 = arith.cmpf oeq, %12, %15 : vector<8x128xf32>
    %cst_5 = arith.constant 0xFF800000 : f32
    %17 = vector.broadcast %cst_5 : f32 to vector<8x128xf32>
    %18 = arith.select %16, %17, %12 : vector<8x128xi1>, vector<8x128xf32>
    %cst_6 = arith.constant dense<0xFF800000> : vector<8xf32>
    %19 = vector.multi_reduction <maximumf>, %18, %cst_6 [1] : vector<8x128xf32> to vector<8xf32>
    %20 = vector.shape_cast %19 : vector<8xf32> to vector<8x1xf32>
    %21 = vector.broadcast %20 : vector<8x1xf32> to vector<8x128xf32>
    %22 = arith.cmpf oeq, %18, %21 : vector<8x128xf32>
    %cst_7 = arith.constant 0xFF800000 : f32
    %23 = vector.broadcast %cst_7 : f32 to vector<8x128xf32>
    %24 = arith.select %22, %23, %18 : vector<8x128xi1>, vector<8x128xf32>
    %cst_8 = arith.constant dense<0xFF800000> : vector<8xf32>
    %25 = vector.multi_reduction <maximumf>, %24, %cst_8 [1] : vector<8x128xf32> to vector<8xf32>
    %26 = vector.shape_cast %25 : vector<8xf32> to vector<8x1xf32>
    %27 = vector.broadcast %26 : vector<8x1xf32> to vector<8x128xf32>
    %28 = arith.cmpf oeq, %24, %27 : vector<8x128xf32>
    %cst_9 = arith.constant 0xFF800000 : f32
    %29 = vector.broadcast %cst_9 : f32 to vector<8x128xf32>
    %30 = arith.select %28, %29, %24 : vector<8x128xi1>, vector<8x128xf32>
    %cst_10 = arith.constant 0xFF800000 : f32
    %31 = vector.broadcast %cst_10 : f32 to vector<8x128xf32>
    %32 = arith.cmpf oeq, %30, %31 : vector<8x128xf32>
    %cst_11 = arith.constant -1.000000e+30 : f32
    %33 = vector.broadcast %cst_11 : f32 to vector<8x128xf32>
    %34 = arith.select %32, %0, %33 : vector<8x128xi1>, vector<8x128xf32>
    %cst_12 = arith.constant dense<0xFF800000> : vector<8xf32>
    %35 = vector.multi_reduction <maximumf>, %34, %cst_12 [1] : vector<8x128xf32> to vector<8xf32>
    %36 = vector.shape_cast %35 : vector<8xf32> to vector<8x1xf32>
    %37 = vector.broadcast %36 : vector<8x1xf32> to vector<8x128xf32>
    %38 = arith.subf %34, %37 : vector<8x128xf32>
    %39 = math.exp %38 : vector<8x128xf32>
    %cst_13 = arith.constant dense<0.000000e+00> : vector<8xf32>
    %40 = vector.multi_reduction <add>, %39, %cst_13 [1] : vector<8x128xf32> to vector<8xf32>
    %41 = vector.shape_cast %40 : vector<8xf32> to vector<8x1xf32>
    %42 = math.log %41 : vector<8x1xf32>
    %43 = arith.addf %36, %42 : vector<8x1xf32>
    %c0_14 = arith.constant 0 : index
    %c0_15 = arith.constant 0 : index
    %44 = vector.load %arg2[%c0_14, %c0_15] : memref<8x128xf32, #tpu.memory_space<vmem>>, vector<8x128xf32>
    %cst_16 = arith.constant 0.000000e+00 : f32
    %45 = vector.broadcast %cst_16 : f32 to vector<8x128xf32>
    %46 = arith.select %32, %44, %45 : vector<8x128xi1>, vector<8x128xf32>
    %cst_17 = arith.constant dense<0.000000e+00> : vector<8xf32>
    %47 = vector.multi_reduction <add>, %46, %cst_17 [1] : vector<8x128xf32> to vector<8xf32>
    %48 = vector.shape_cast %47 : vector<8xf32> to vector<8x1xf32>
    %49 = arith.mulf %46, %0 : vector<8x128xf32>
    %cst_18 = arith.constant dense<0.000000e+00> : vector<8xf32>
    %50 = vector.multi_reduction <add>, %49, %cst_18 [1] : vector<8x128xf32> to vector<8xf32>
    %51 = vector.shape_cast %50 : vector<8xf32> to vector<8x1xf32>
    %52 = arith.mulf %43, %48 : vector<8x1xf32>
    %53 = arith.subf %52, %51 : vector<8x1xf32>
    %c8_i32 = arith.constant 8 : i32
    %54 = arith.muli %arg0, %c8_i32 : i32
    %55 = tpu.iota {dimensions = array<i32: 0>} : vector<8x1xi32>
    %56 = vector.broadcast %54 : i32 to vector<8x1xi32>
    %57 = arith.addi %56, %55 : vector<8x1xi32>
    %c4_i32 = arith.constant 4 : i32
    %58 = vector.broadcast %c4_i32 : i32 to vector<8x1xi32>
    %59 = arith.cmpi slt, %57, %58 : vector<8x1xi32>
    %cst_19 = arith.constant 0.000000e+00 : f32
    %60 = vector.broadcast %cst_19 : f32 to vector<8x1xf32>
    %61 = arith.select %59, %53, %60 : vector<8x1xi1>, vector<8x1xf32>
    %cst_20 = arith.constant dense<0.000000e+00> : vector<1xf32>
    %62 = vector.multi_reduction <add>, %61, %cst_20 [0] : vector<8x1xf32> to vector<1xf32>
    %63 = vector.shape_cast %62 : vector<1xf32> to vector<1x1xf32>
    %64 = vector.shape_cast %63 : vector<1x1xf32> to vector<1x1x1xf32>
    %65 = vector.shape_cast %64 : vector<1x1x1xf32> to vector<1x1x1xf32>
    %66 = vector.broadcast %65 : vector<1x1x1xf32> to vector<1x8x128xf32>
    %c0_21 = arith.constant 0 : index
    %c0_22 = arith.constant 0 : index
    %c0_23 = arith.constant 0 : index
    %67 = vector.load %arg3[%c0_21, %c0_22, %c0_23] : memref<1x8x128xf32, #tpu.memory_space<vmem>>, vector<1x8x128xf32>
    tpu.vector_store %arg3[%c0_21, %c0_22, %c0_23], %66 {strides = array<i32>} : memref<1x8x128xf32, #tpu.memory_space<vmem>>, vector<1x8x128xf32>,
    return
  }
  func.func @transform_0(%arg0: i32) -> (i32, i32) {
    %c0_i32 = arith.constant 0 : i32
    %c0_i32_0 = arith.constant 0 : i32
    return %arg0, %c0_i32 : i32, i32
  }
  func.func @transform_1(%arg0: i32) -> (i32, i32) {
    %c0_i32 = arith.constant 0 : i32
    %c0_i32_0 = arith.constant 0 : i32
    return %arg0, %c0_i32 : i32, i32
  }
  func.func @transform_2(%arg0: i32) -> (i32, i32, i32) {
    %c0_i32 = arith.constant 0 : i32
    %c0_i32_0 = arith.constant 0 : i32
    %c0_i32_1 = arith.constant 0 : i32
    return %arg0, %c0_i32, %c0_i32_0 : i32, i32, i32
  }
}

</mosaic_0001>

<llo_original>
// kernel: tpu_custom_call.1
$region0: #{tpu_custom_call.1}
  #allocation0 [shape = 'u32[]', space=smem, size = 0x4, offset = 0x4, fixed_abs, tag = 'smem constant byte address 0x4 - core index']
  #allocation1 [shape = 'u32[144,128]{1,0:T(1,128)}', space=vmem, size = 0x12000, scoped, tag = 'internal scratch']
  %s0 = inlined_call_operand.hbm [shape: f32[8,128], index: 0, kind: input, shape index: {}]
  %s1 = inlined_call_operand.hbm [shape: f32[8,128], index: 1, kind: input, shape index: {}]
  %s2 = inlined_call_operand.hbm [shape: f32[1,8,128], index: 2, kind: output, shape index: {}]
  %s3 = sld [smem:[#allocation0]]
  $region26: #{tpu_custom_call.1} parent=0
    _
  %s5 = ssub.s32 1, %s3
  %s6 = scalar_select 0, %s5, %s3
  $region1: #{tpu_custom_call.1} parent=0
    #allocation2 [shape = 'u8[4096]{0}', space=vmem, size = 0x1000, scoped, tag = 'input window, operand 0, single buffered']
    #allocation3 [shape = 's32[1]{0}', space=sflag, size = 0x4, scoped, tag = 'scoped memory for tpu_custom_call.1']
    #allocation4 [shape = 's32[1]{0}', space=sflag, size = 0x4, scoped, tag = 'scoped memory for tpu_custom_call.1']
    #allocation5 [shape = 'u8[4096]{0}', space=vmem, size = 0x1000, scoped, tag = 'input window, operand 1, single buffered']
    #allocation6 [shape = 's32[1]{0}', space=sflag, size = 0x4, scoped, tag = 'scoped memory for tpu_custom_call.1']
    #allocation7 [shape = 'u8[4096]{0}', space=vmem, size = 0x1000, scoped, tag = 'output window, operand 0, single buffered']
    %7 = vsyncpa [#allocation3], 0
    %8 = vsyncpa [#allocation6], 0
    %9 = vsyncpa [#allocation4], 0
    // Predicated region
    $region2: #{tpu_custom_call.1} parent=1 // pred_check
      _
    $region3: #{tpu_custom_call.1} parent=1 // pred_check_branch
      %11 = sbr.rel (0) target = $region5
    $region4: #{tpu_custom_call.1} parent=1 // pred_region
      %s13 = ssub.s32 128, 128
      %14 = vsyncadd [#allocation3], %s13
      %s16 = sshll.u32 [#allocation2], 4
      %s17 = int_to_ptr.vmem [resolvable:$true] %s16
      %19 = dma.hbm_to_vmem [thread:$0]  %s0, 128, %s17, [#allocation3]
    $region5: #{tpu_custom_call.1} parent=1 // pred_fallthru
      _
    // Predicated region
    $region6: #{tpu_custom_call.1} parent=1 // pred_check
      _
    $region7: #{tpu_custom_call.1} parent=1 // pred_check_branch
      %21 = sbr.rel (0) target = $region9
    $region8: #{tpu_custom_call.1} parent=1 // pred_region
      %s23 = ssub.s32 128, 128
      %24 = vsyncadd [#allocation6], %s23
      %s26 = sshll.u32 [#allocation5], 4
      %s27 = int_to_ptr.vmem [resolvable:$true] %s26
      %29 = dma.hbm_to_vmem [thread:$0]  %s1, 128, %s27, [#allocation6]
    $region9: #{tpu_custom_call.1} parent=1 // pred_fallthru
      _
    // Predicated region
    $region10: #{tpu_custom_call.1} parent=1 // pred_check
      _
    $region11: #{tpu_custom_call.1} parent=1 // pred_check_branch
      %31 = sbr.rel (0) target = $region13
    $region12: #{tpu_custom_call.1} parent=1 // pred_region
      %32 = dma.done [#allocation3], 128
    $region13: #{tpu_custom_call.1} parent=1 // pred_fallthru
      _
    // Predicated region
    $region14: #{tpu_custom_call.1} parent=1 // pred_check
      _
    $region15: #{tpu_custom_call.1} parent=1 // pred_check_branch
      %34 = sbr.rel (0) target = $region17
    $region16: #{tpu_custom_call.1} parent=1 // pred_region
      %35 = dma.done [#allocation6], 128
    $region17: #{tpu_custom_call.1} parent=1 // pred_fallthru
      _
    %v36 = vld [vmem:[#allocation2] sm:$0xff]
    %37 = vmax.xlane.f32.xlu0 %v36
    %v38 = vpop.xlane.xlu0 %37
    %vm39 = vcmp.eq.f32.partialorder %v36, %v38
    %v40 = vsel %vm39, -inf, %v36
    %41 = vmax.xlane.f32.xlu0 %v40
    %v42 = vpop.xlane.xlu0 %41
    %vm43 = vcmp.eq.f32.partialorder %v40, %v42
    %v44 = vsel %vm43, -inf, %v40
    %45 = vmax.xlane.f32.xlu0 %v44
    %v46 = vpop.xlane.xlu0 %45
    %vm47 = vcmp.eq.f32.partialorder %v44, %v46
    %v48 = vsel %vm47, -inf, %v44
    %49 = vmax.xlane.f32.xlu0 %v48
    %v50 = vpop.xlane.xlu0 %49
    %vm51 = vcmp.eq.f32.partialorder %v48, %v50
    %v52 = vsel %vm51, -inf, %v48
    %53 = vmax.xlane.f32.xlu0 %v52
    %v54 = vpop.xlane.xlu0 %53
    %vm55 = vcmp.eq.f32.partialorder %v52, %v54
    %v56 = vsel %vm55, -inf, %v52
    %vm57 = vcmp.eq.f32.partialorder %v56, -inf
    %v58 = vsel %vm57, %v36, -1e+30
    %59 = vmax.xlane.f32.xlu0 %v58
    %v60 = vpop.xlane.xlu0 %59
    %v61 = vsub.f32 %v58, %v60
    %v62 = vmul.f32 %v61, 1.442695
    %v63 = vpow.pop %v62
    %64 = vadd.xlane.f32.xlu0 %v63
    %v65 = vpop.xlane.xlu0 %64
    %v66 = vlog2.pop %v65
    %v67 = vmul.f32 %v66, 0.6931472
    %v68 = vadd.f32 %v60, %v67
    %v69 = vld [vmem:[#allocation5] sm:$0xff]
    %v70 = vsel %vm57, %v69, 0.0
    %71 = vadd.xlane.f32.xlu0 %v70
    %v72 = vpop.xlane.xlu0 %71
    %v73 = vmul.f32 %v70, %v36
    %74 = vadd.xlane.f32.xlu0 %v73
    %v75 = vpop.xlane.xlu0 %74
    %v76 = vmul.f32 %v68, %v72
    %v77 = vsub.f32 %v76, %v75
    %s78 = smul.u32 0, 8
    %v79 = vlaneseq
    %v80 = vshrl.u32 %v79, 7
    %v81 = vstv %s78
    %v82 = vadd.s32 %v81, %v80
    %vm83 = vcmp.lt.s32.totalorder %v82, 4
    %v84 = vsel %vm83, %v77, 0.0
    %v85 = vrot.slane %v84, 4
    %v86 = vadd.f32 %v84, %v85
    %v87 = vrot.slane %v86, 2
    %v88 = vadd.f32 %v86, %v87
    %v89 = vrot.slane %v88, 1
    %v90 = vadd.f32 %v88, %v89
    %91 = vst [vmem:[#allocation7] sm:$0xff] %v90
    // Predicated region
    $region18: #{tpu_custom_call.1} parent=1 // pred_check
      _
    $region19: #{tpu_custom_call.1} parent=1 // pred_check_branch
      %93 = sbr.rel (0) target = $region21
    $region20: #{tpu_custom_call.1} parent=1 // pred_region
      %s95 = ssub.s32 128, 128
      %96 = vsyncadd [#allocation4], %s95
      %s98 = sshll.u32 [#allocation7], 4
      %s99 = int_to_ptr.vmem [resolvable:$true] %s98
      %101 = dma.vmem_to_hbm [thread:$0]  %s99, 128, %s2, [#allocation4]
    $region21: #{tpu_custom_call.1} parent=1 // pred_fallthru
      _
    // Predicated region
    $region22: #{tpu_custom_call.1} parent=1 // pred_check
      _
    $region23: #{tpu_custom_call.1} parent=1 // pred_check_branch
      %103 = sbr.rel (0) target = $region25
    $region24: #{tpu_custom_call.1} parent=1 // pred_region
      %104 = dma.done [#allocation4], 128
    $region25: #{tpu_custom_call.1} parent=1 // pred_fallthru
      _
    %105 = vsyncpa [#allocation3], 1
    %106 = vsyncpa [#allocation6], 1
    %107 = vsyncpa [#allocation4], 1

</llo_original>
